<compile_context>
chip_gen: v5e
topology: v5e:2x2
jax: 0.10.0
libtpu: 0.0.40
codegen_flags: <defaults>
</compile_context>

<pallas_src>
import functools

import jax
import jax.numpy as jnp
from jax.experimental import pallas as pl
from jax.experimental.pallas import tpu as pltpu


def _round_up(n, m):
    return ((n + m - 1) // m) * m


@functools.lru_cache(maxsize=1)
def _vmem_budget_bytes():
    """~75% of the per-core VMEM capacity (generation-aware cap)."""
    cap = 64 << 20  # conservative fallback (v7x per-TensorCore VMEM)
    try:
        info = pltpu.get_tpu_info()
        cap = int(getattr(info, "vmem_capacity_bytes", cap))
    except Exception:
        pass
    return (cap * 3) // 4


def _pick_batch_tile(batch, batch_tile):
    """Sublane-friendly batch tile; keep >= ~4 grid steps so the BlockSpec
    pipeline still overlaps DMA with compute when the grid is sharded across
    both TensorCores on v7x."""
    tb = min(batch_tile, _round_up(batch, 16))
    while tb > 128 and pl.cdiv(batch, tb) < 4:
        tb //= 2
    return max(_round_up(tb, 16), 16)


def generator_kernel(x_ref,
                     w1_ref, b1_ref,
                     w2_ref, b2_ref,
                     w3_ref, b3_ref,
                     w4_ref, b4_ref,
                     o_ref):
    """Fused 4-layer MLP: three (matmul + LeakyReLU(0.2)) stages + (matmul + tanh).

    Matmul operands are bf16 (MXU-native) with f32 accumulation; bias add /
    LeakyReLU / tanh are done in f32 (safe on v5e, which has no bf16 VPU/EUP).
    """
    def leaky_relu(h):
        return jnp.maximum(h, 0.2 * h)

    x = x_ref[...].astype(jnp.bfloat16)  # cast in-kernel; no wrapper round trip

    h = jnp.dot(x, w1_ref[...], preferred_element_type=jnp.float32) + b1_ref[...]
    h = leaky_relu(h).astype(jnp.bfloat16)

    h = jnp.dot(h, w2_ref[...], preferred_element_type=jnp.float32) + b2_ref[...]
    h = leaky_relu(h).astype(jnp.bfloat16)

    h = jnp.dot(h, w3_ref[...], preferred_element_type=jnp.float32) + b3_ref[...]
    h = leaky_relu(h).astype(jnp.bfloat16)

    h = jnp.dot(h, w4_ref[...], preferred_element_type=jnp.float32) + b4_ref[...]
    o_ref[...] = jnp.tanh(h).astype(o_ref.dtype)  # bf16, lane-dense (padded out dim)


def prepare_generator_params(params):
    """One-time parameter prep: pad feature dims to multiples of 128 and cast
    weights to bf16 (biases stay f32).  Zero padding is exact: padded weight
    rows/cols and padded biases are zero, so padded hidden columns stay zero
    through LeakyReLU and contribute nothing downstream; padded output columns
    are sliced off in the wrapper.  The input (K) dim of w1 is left unpadded
    to match the un-padded x."""
    def pad2(a, rows, cols, dtype):
        return jnp.pad(a, ((0, rows - a.shape[0]), (0, cols - a.shape[1]))).astype(dtype)

    Di = params["w1"].shape[0]
    H1 = params["w1"].shape[1]
    H2 = params["w2"].shape[1]
    H3 = params["w3"].shape[1]
    Do = params["w4"].shape[1]
    H1p, H2p, H3p, Dop = (_round_up(d, 128) for d in (H1, H2, H3, Do))

    return {
        "w1": pad2(params["w1"], Di, H1p, jnp.bfloat16),
        "w2": pad2(params["w2"], H1p, H2p, jnp.bfloat16),
        "w3": pad2(params["w3"], H2p, H3p, jnp.bfloat16),
        "w4": pad2(params["w4"], H3p, Dop, jnp.bfloat16),
        "b1": pad2(params["b1"], 1, H1p, jnp.float32),
        "b2": pad2(params["b2"], 1, H2p, jnp.float32),
        "b3": pad2(params["b3"], 1, H3p, jnp.float32),
        "b4": pad2(params["b4"], 1, Dop, jnp.float32),
    }


@functools.partial(jax.jit, static_argnames=("output_dim", "batch_tile"))
def generator_forward(x, prepped, *, output_dim, batch_tile=512):
    """Run the fused Generator forward pass via pallas_call.

    x: [B, input_dim] float32 (consumed as-is, no pad/cast pass)
    prepped: output of prepare_generator_params (padded bf16 weights / f32 biases)
    Returns [B, output_dim] bfloat16 (tanh output).
    """
    B, Di = x.shape
    w1, w2, w3, w4 = prepped["w1"], prepped["w2"], prepped["w3"], prepped["w4"]
    b1, b2, b3, b4 = prepped["b1"], prepped["b2"], prepped["b3"], prepped["b4"]
    H1p, H2p, H3p, Dop = w1.shape[1], w2.shape[1], w3.shape[1], w4.shape[1]
    assert w1.shape[0] == Di, "prepared params do not match x's feature dim"

    tb = _pick_batch_tile(B, batch_tile)
    grid = pl.cdiv(B, tb)

    # x is streamed per batch tile; weights/biases are small, so keep them as
    # full (untiled) blocks with a constant index_map -> Pallas re-uses the
    # resident copy across grid steps.
    in_specs = [pl.BlockSpec((tb, Di), lambda i: (i, 0))]
    args = [x]
    for arr in (w1, b1, w2, b2, w3, b3, w4, b4):
        in_specs.append(pl.BlockSpec(arr.shape, lambda i: (0, 0)))
        args.append(arr)

    out_spec = pl.BlockSpec((tb, Dop), lambda i: (i, 0))

    # --- VMEM budget: double-buffered streamed tiles + resident (double-
    #     buffered) weights + in-kernel activation temporaries, capped at ~75%
    #     of this generation's VMEM capacity. ---
    weight_bytes = sum(int(a.size) * a.dtype.itemsize
                       for a in (w1, w2, w3, w4, b1, b2, b3, b4))
    stream_bytes = 2 * (tb * Di * 4) + 2 * (tb * Dop * 2)  # x (f32) + out (bf16)
    act_bytes = tb * (H1p + H2p + H3p + Dop) * 6           # f32 + bf16 temporaries
    vmem_bytes = 2 * weight_bytes + stream_bytes + act_bytes
    vmem_limit = int(min(max(int(vmem_bytes * 1.5), 16 << 20), _vmem_budget_bytes()))

    out = pl.pallas_call(
        generator_kernel,
        out_shape=jax.ShapeDtypeStruct((B, Dop), jnp.bfloat16),
        grid_spec=pltpu.PrefetchScalarGridSpec(
            num_scalar_prefetch=0,
            grid=(grid,),
            in_specs=in_specs,
            out_specs=out_spec,
        ),
        compiler_params=pltpu.CompilerParams(
            dimension_semantics=("parallel",),   # megacore sharding on v7x
            vmem_limit_bytes=vmem_limit,
        ),
    )(*args)

    return out[:, :output_dim]


def init_generator_params(key, input_dim, output_dim, hidden_dim):
    """Deterministic PyTorch-Linear-style init (uniform(-1/sqrt(fan_in), 1/sqrt(fan_in)))."""
    dims = [
        (input_dim, hidden_dim),
        (hidden_dim, hidden_dim * 2),
        (hidden_dim * 2, hidden_dim * 4),
        (hidden_dim * 4, output_dim),
    ]
    params = {}
    for idx, (fan_in, fan_out) in enumerate(dims, start=1):
        key, kw, kb = jax.random.split(key, 3)
        bound = 1.0 / (fan_in ** 0.5)
        params[f"w{idx}"] = jax.random.uniform(
            kw, (fan_in, fan_out), jnp.float32, minval=-bound, maxval=bound)
        params[f"b{idx}"] = jax.random.uniform(
            kb, (1, fan_out), jnp.float32, minval=-bound, maxval=bound)
    return params


def generator_reference_bf16(x, params):
    """Pure-JAX reference with matching bf16 matmul operands / f32 accumulation."""
    h = x.astype(jnp.bfloat16)
    for i in (1, 2, 3):
        h = jnp.dot(h, params[f"w{i}"].astype(jnp.bfloat16),
                    preferred_element_type=jnp.float32) + params[f"b{i}"]
        h = jnp.where(h > 0, h, 0.2 * h).astype(jnp.bfloat16)
    h = jnp.dot(h, params["w4"].astype(jnp.bfloat16),
                preferred_element_type=jnp.float32) + params["b4"]
    return jnp.tanh(h)


def generator_reference_f32(x, params):
    """Pure-f32 reference of the original module's math."""
    h = x
    for i in (1, 2, 3):
        h = h @ params[f"w{i}"] + params[f"b{i}"]
        h = jnp.where(h > 0, h, 0.2 * h)
    h = h @ params["w4"] + params["b4"]
    return jnp.tanh(h)


if __name__ == "__main__":
    # Small shapes consistent with the module; B chosen so the grid has several
    # steps (pipelining + megacore sharding actually exercised: tb=128, grid=4).
    B, input_dim, hidden_dim, output_dim = 512, 32, 32, 16

    key = jax.random.PRNGKey(0)
    key, kx = jax.random.split(key)
    x = jax.random.normal(kx, (B, input_dim), jnp.float32)

    params = init_generator_params(key, input_dim, output_dim, hidden_dim)
    prepped = prepare_generator_params(params)   # one-time prep, outside forward

    out = jax.block_until_ready(
        generator_forward(x, prepped, output_dim=output_dim))

    assert out.shape == (B, output_dim)
    assert out.dtype == jnp.bfloat16

    out_f32 = out.astype(jnp.float32)
    ref_bf16 = generator_reference_bf16(x, params).astype(jnp.float32)
    ref_f32 = generator_reference_f32(x, params)
    # bf16 matmul operands + bf16 output: ~3 significant digits; tanh in [-1, 1].
    assert jnp.allclose(out_f32, ref_bf16, atol=2e-2, rtol=2e-2)
    assert jnp.allclose(out_f32, ref_f32, atol=5e-2, rtol=5e-2)

    print("KERNEL_OK")
</pallas_src>

<mosaic_0001>
module attributes {stable_mosaic.version = 11 : i64} {
  func.func @generator_kernel(%arg0: i32, %arg1: memref<128x32xf32, #tpu.memory_space<vmem>>, %arg2: memref<32x128xbf16, #tpu.memory_space<vmem>>, %arg3: memref<1x128xf32, #tpu.memory_space<vmem>>, %arg4: memref<128x128xbf16, #tpu.memory_space<vmem>>, %arg5: memref<1x128xf32, #tpu.memory_space<vmem>>, %arg6: memref<128x128xbf16, #tpu.memory_space<vmem>>, %arg7: memref<1x128xf32, #tpu.memory_space<vmem>>, %arg8: memref<128x128xbf16, #tpu.memory_space<vmem>>, %arg9: memref<1x128xf32, #tpu.memory_space<vmem>>, %arg10: memref<128x128xbf16, #tpu.memory_space<vmem>>) attributes {dimension_semantics = [#tpu.dimension_semantics<parallel>], iteration_bounds = array<i64: 4>, scalar_prefetch = 0 : i64, scratch_operands = 0 : i64, tpu.core_type = #tpu.core_type<tc>, window_params = [{transform_indices = @transform_0, window_bounds = array<i64: 128, 32>}, {pipeline_mode = #tpu.pipeline_mode<synchronous>, transform_indices = @transform_1, window_bounds = array<i64: 32, 128>}, {pipeline_mode = #tpu.pipeline_mode<synchronous>, transform_indices = @transform_2, window_bounds = array<i64: 1, 128>}, {pipeline_mode = #tpu.pipeline_mode<synchronous>, transform_indices = @transform_3, window_bounds = array<i64: 128, 128>}, {pipeline_mode = #tpu.pipeline_mode<synchronous>, transform_indices = @transform_4, window_bounds = array<i64: 1, 128>}, {pipeline_mode = #tpu.pipeline_mode<synchronous>, transform_indices = @transform_5, window_bounds = array<i64: 128, 128>}, {pipeline_mode = #tpu.pipeline_mode<synchronous>, transform_indices = @transform_6, window_bounds = array<i64: 1, 128>}, {pipeline_mode = #tpu.pipeline_mode<synchronous>, transform_indices = @transform_7, window_bounds = array<i64: 128, 128>}, {pipeline_mode = #tpu.pipeline_mode<synchronous>, transform_indices = @transform_8, window_bounds = array<i64: 1, 128>}, {transform_indices = @transform_9, window_bounds = array<i64: 128, 128>}]} {
    %c0 = arith.constant 0 : index
    %c0_0 = arith.constant 0 : index
    %0 = vector.load %arg1[%c0, %c0_0] : memref<128x32xf32, #tpu.memory_space<vmem>>, vector<128x32xf32>
    %1 = arith.truncf %0 : vector<128x32xf32> to vector<128x32xbf16>
    %c0_1 = arith.constant 0 : index
    %c0_2 = arith.constant 0 : index
    %2 = vector.load %arg2[%c0_1, %c0_2] : memref<32x128xbf16, #tpu.memory_space<vmem>>, vector<32x128xbf16>
    %cst = arith.constant dense<0.000000e+00> : vector<128x128xf32>
    %3 = tpu.matmul %1, %2, %cst {dimension_numbers = #tpu.dot_dimension_numbers<[1], [0], [0], [1], [0, 0, 1, 1], [], []>} : vector<128x32xbf16>, vector<32x128xbf16>, vector<128x128xf32> -> vector<128x128xf32>
    %c0_3 = arith.constant 0 : index
    %c0_4 = arith.constant 0 : index
    %4 = vector.load %arg3[%c0_3, %c0_4] : memref<1x128xf32, #tpu.memory_space<vmem>>, vector<1x128xf32>
    %5 = vector.broadcast %4 : vector<1x128xf32> to vector<128x128xf32>
    %6 = arith.addf %3, %5 : vector<128x128xf32>
    %cst_5 = arith.constant 2.000000e-01 : f32
    %7 = vector.broadcast %cst_5 : f32 to vector<128x128xf32>
    %8 = arith.mulf %7, %6 : vector<128x128xf32>
    %9 = arith.maximumf %6, %8 : vector<128x128xf32>
    %10 = arith.truncf %9 : vector<128x128xf32> to vector<128x128xbf16>
    %c0_6 = arith.constant 0 : index
    %c0_7 = arith.constant 0 : index
    %11 = vector.load %arg4[%c0_6, %c0_7] : memref<128x128xbf16, #tpu.memory_space<vmem>>, vector<128x128xbf16>
    %cst_8 = arith.constant dense<0.000000e+00> : vector<128x128xf32>
    %12 = tpu.matmul %10, %11, %cst_8 {dimension_numbers = #tpu.dot_dimension_numbers<[1], [0], [0], [1], [0, 0, 1, 1], [], []>} : vector<128x128xbf16>, vector<128x128xbf16>, vector<128x128xf32> -> vector<128x128xf32>
    %c0_9 = arith.constant 0 : index
    %c0_10 = arith.constant 0 : index
    %13 = vector.load %arg5[%c0_9, %c0_10] : memref<1x128xf32, #tpu.memory_space<vmem>>, vector<1x128xf32>
    %14 = vector.broadcast %13 : vector<1x128xf32> to vector<128x128xf32>
    %15 = arith.addf %12, %14 : vector<128x128xf32>
    %cst_11 = arith.constant 2.000000e-01 : f32
    %16 = vector.broadcast %cst_11 : f32 to vector<128x128xf32>
    %17 = arith.mulf %16, %15 : vector<128x128xf32>
    %18 = arith.maximumf %15, %17 : vector<128x128xf32>
    %19 = arith.truncf %18 : vector<128x128xf32> to vector<128x128xbf16>
    %c0_12 = arith.constant 0 : index
    %c0_13 = arith.constant 0 : index
    %20 = vector.load %arg6[%c0_12, %c0_13] : memref<128x128xbf16, #tpu.memory_space<vmem>>, vector<128x128xbf16>
    %cst_14 = arith.constant dense<0.000000e+00> : vector<128x128xf32>
    %21 = tpu.matmul %19, %20, %cst_14 {dimension_numbers = #tpu.dot_dimension_numbers<[1], [0], [0], [1], [0, 0, 1, 1], [], []>} : vector<128x128xbf16>, vector<128x128xbf16>, vector<128x128xf32> -> vector<128x128xf32>
    %c0_15 = arith.constant 0 : index
    %c0_16 = arith.constant 0 : index
    %22 = vector.load %arg7[%c0_15, %c0_16] : memref<1x128xf32, #tpu.memory_space<vmem>>, vector<1x128xf32>
    %23 = vector.broadcast %22 : vector<1x128xf32> to vector<128x128xf32>
    %24 = arith.addf %21, %23 : vector<128x128xf32>
    %cst_17 = arith.constant 2.000000e-01 : f32
    %25 = vector.broadcast %cst_17 : f32 to vector<128x128xf32>
    %26 = arith.mulf %25, %24 : vector<128x128xf32>
    %27 = arith.maximumf %24, %26 : vector<128x128xf32>
    %28 = arith.truncf %27 : vector<128x128xf32> to vector<128x128xbf16>
    %c0_18 = arith.constant 0 : index
    %c0_19 = arith.constant 0 : index
    %29 = vector.load %arg8[%c0_18, %c0_19] : memref<128x128xbf16, #tpu.memory_space<vmem>>, vector<128x128xbf16>
    %cst_20 = arith.constant dense<0.000000e+00> : vector<128x128xf32>
    %30 = tpu.matmul %28, %29, %cst_20 {dimension_numbers = #tpu.dot_dimension_numbers<[1], [0], [0], [1], [0, 0, 1, 1], [], []>} : vector<128x128xbf16>, vector<128x128xbf16>, vector<128x128xf32> -> vector<128x128xf32>
    %c0_21 = arith.constant 0 : index
    %c0_22 = arith.constant 0 : index
    %31 = vector.load %arg9[%c0_21, %c0_22] : memref<1x128xf32, #tpu.memory_space<vmem>>, vector<1x128xf32>
    %32 = vector.broadcast %31 : vector<1x128xf32> to vector<128x128xf32>
    %33 = arith.addf %30, %32 : vector<128x128xf32>
    %34 = math.tanh %33 : vector<128x128xf32>
    %35 = arith.truncf %34 : vector<128x128xf32> to vector<128x128xbf16>
    %c0_23 = arith.constant 0 : index
    %c0_24 = arith.constant 0 : index
    %36 = vector.load %arg10[%c0_23, %c0_24] : memref<128x128xbf16, #tpu.memory_space<vmem>>, vector<128x128xbf16>
    tpu.vector_store %arg10[%c0_23, %c0_24], %35 {strides = array<i32>} : memref<128x128xbf16, #tpu.memory_space<vmem>>, vector<128x128xbf16>,
    return
  }
  func.func @transform_0(%arg0: i32) -> (i32, i32) {
    %c0_i32 = arith.constant 0 : i32
    %c0_i32_0 = arith.constant 0 : i32
    return %arg0, %c0_i32 : i32, i32
  }
  func.func @transform_1(%arg0: i32) -> (i32, i32) {
    %c0_i32 = arith.constant 0 : i32
    %c0_i32_0 = arith.constant 0 : i32
    %c0_i32_1 = arith.constant 0 : i32
    return %c0_i32, %c0_i32_0 : i32, i32
  }
  func.func @transform_2(%arg0: i32) -> (i32, i32) {
    %c0_i32 = arith.constant 0 : i32
    %c0_i32_0 = arith.constant 0 : i32
    %c0_i32_1 = arith.constant 0 : i32
    return %c0_i32, %c0_i32_0 : i32, i32
  }
  func.func @transform_3(%arg0: i32) -> (i32, i32) {
    %c0_i32 = arith.constant 0 : i32
    %c0_i32_0 = arith.constant 0 : i32
    %c0_i32_1 = arith.constant 0 : i32
    return %c0_i32, %c0_i32_0 : i32, i32
  }
  func.func @transform_4(%arg0: i32) -> (i32, i32) {
    %c0_i32 = arith.constant 0 : i32
    %c0_i32_0 = arith.constant 0 : i32
    %c0_i32_1 = arith.constant 0 : i32
    return %c0_i32, %c0_i32_0 : i32, i32
  }
  func.func @transform_5(%arg0: i32) -> (i32, i32) {
    %c0_i32 = arith.constant 0 : i32
    %c0_i32_0 = arith.constant 0 : i32
    %c0_i32_1 = arith.constant 0 : i32
    return %c0_i32, %c0_i32_0 : i32, i32
  }
  func.func @transform_6(%arg0: i32) -> (i32, i32) {
    %c0_i32 = arith.constant 0 : i32
    %c0_i32_0 = arith.constant 0 : i32
    %c0_i32_1 = arith.constant 0 : i32
    return %c0_i32, %c0_i32_0 : i32, i32
  }
  func.func @transform_7(%arg0: i32) -> (i32, i32) {
    %c0_i32 = arith.constant 0 : i32
    %c0_i32_0 = arith.constant 0 : i32
    %c0_i32_1 = arith.constant 0 : i32
    return %c0_i32, %c0_i32_0 : i32, i32
  }
  func.func @transform_8(%arg0: i32) -> (i32, i32) {
    %c0_i32 = arith.constant 0 : i32
    %c0_i32_0 = arith.constant 0 : i32
    %c0_i32_1 = arith.constant 0 : i32
    return %c0_i32, %c0_i32_0 : i32, i32
  }
  func.func @transform_9(%arg0: i32) -> (i32, i32) {
    %c0_i32 = arith.constant 0 : i32
    %c0_i32_0 = arith.constant 0 : i32
    return %arg0, %c0_i32 : i32, i32
  }
}

</mosaic_0001>

<llo_original>
// kernel: generator_forward.1
$region0: #{generator_forward.1}
  #allocation0 [shape = 'u32[]', space=smem, size = 0x4, offset = 0x4, fixed_abs, tag = 'smem constant byte address 0x4 - core index']
  #allocation1 [shape = 'u32[72,128]{1,0:T(1,128)}', space=vmem, size = 0x9000, scoped, tag = 'internal scratch']
  %s0 = inlined_call_operand.vmem [shape: f32[512,32], index: 0, kind: input, shape index: {}]
  %s1 = inlined_call_operand.vmem [shape: bf16[32,128], index: 1, kind: input, shape index: {}]
  %s2 = inlined_call_operand.vmem [shape: f32[1,128], index: 2, kind: input, shape index: {}]
  %s3 = inlined_call_operand.vmem [shape: bf16[128,128], index: 3, kind: input, shape index: {}]
  %s4 = inlined_call_operand.vmem [shape: f32[1,128], index: 4, kind: input, shape index: {}]
  %s5 = inlined_call_operand.vmem [shape: bf16[128,128], index: 5, kind: input, shape index: {}]
  %s6 = inlined_call_operand.vmem [shape: f32[1,128], index: 6, kind: input, shape index: {}]
  %s7 = inlined_call_operand.vmem [shape: bf16[128,128], index: 7, kind: input, shape index: {}]
  %s8 = inlined_call_operand.vmem [shape: f32[1,128], index: 8, kind: input, shape index: {}]
  %s9 = inlined_call_operand.vmem [shape: bf16[512,128], index: 9, kind: output, shape index: {}]
  %s10 = sld [smem:[#allocation0]]
  $region69: #{generator_forward.1} parent=0
    _
  %s12 = ssub.s32 1, %s10
  %s13 = scalar_select 0, %s12, %s10
  loop: start=0, step=1, limit=6
  $region2: #{generator_forward.1} parent=0 // loop_pre_header
    _
  $region3: #{generator_forward.1} parent=0 // loop_header
    %s15 = sphi 0, %s19
    %p16 = scmp.ge.s32.totalorder %s15, 6
    %s25 = sphi 0, %s27
    %s28 = sphi 0, %s25
    %s29 = sphi 0, %s28
    %s45 = sphi 0, %s29
    %s49 = sphi 0, %s49
    %s51 = sphi 0, %s49
    %s52 = sphi 0, %s51
    %s66 = sphi 0, %s52
    %s70 = sphi 0, %s70
    %s72 = sphi 0, %s70
    %s73 = sphi 0, %s72
    %s87 = sphi 0, %s73
    %s91 = sphi 0, %s91
    %s93 = sphi 0, %s91
    %s94 = sphi 0, %s93
    %s108 = sphi 0, %s94
    %s112 = sphi 0, %s112
    %s114 = sphi 0, %s112
    %s115 = sphi 0, %s114
    %s129 = sphi 0, %s115
    %s133 = sphi 0, %s133
    %s135 = sphi 0, %s133
    %s136 = sphi 0, %s135
    %s150 = sphi 0, %s136
    %s154 = sphi 0, %s154
    %s156 = sphi 0, %s154
    %s157 = sphi 0, %s156
    %s171 = sphi 0, %s157
    %s175 = sphi 0, %s175
    %s177 = sphi 0, %s175
    %s178 = sphi 0, %s177
    %s192 = sphi 0, %s178
    %s196 = sphi 0, %s196
    %s198 = sphi 0, %s196
    %s199 = sphi 0, %s198
    %s213 = sphi 0, %s199
    %s219 = sphi 0, %s221
    %s222 = sphi 0, %s219
    %s223 = sphi 0, %s222
    %s239 = sphi 0, %s223
  $region4: #{generator_forward.1} parent=0 // loop_header_branch
    %18 = sbr.rel (%p16) target = $region8
  $region5: #{generator_forward.1} parent=0 // loop_body
    %s20 = ssub.s32 %s15, 1
    %s21 = ssub.s32 %s15, 2
    %s22 = sadd.s32 %s15, 1
    %s23 = ssub.s32 %s15, %s22
    %p24 = scmp.eq.s32.totalorder %s23, 0
    %s26 = sadd.s32 %s25, 1
    %s27 = scalar_select %p24, %s25, %s26
    %p30 = pneg %p24
    %p31 = scmp.eq.s32.totalorder %s15, 3
    %p32 = por %p30, %p31
    %p33 = scmp.ne.s32.totalorder %s25, %s28
    %p34 = scmp.eq.s32.totalorder %s15, 0
    %p35 = por %p33, %p34
    %p36 = scmp.ne.s32.totalorder %s25, %s28
    %p37 = scmp.eq.s32.totalorder %s20, 3
    %p38 = por %p36, %p37
    %p39 = scmp.ne.s32.totalorder %s28, %s29
    %p40 = scmp.eq.s32.totalorder %s20, 0
    %p41 = por %p39, %p40
    %p42 = scmp.ne.s32.totalorder %s28, %s29
    %p43 = scmp.eq.s32.totalorder %s21, 3
    %p44 = por %p42, %p43
    %p46 = scmp.ne.s32.totalorder %s29, %s45
    %p47 = scmp.eq.s32.totalorder %s21, 0
    %p48 = por %p46, %p47
    %s50 = sadd.s32 %s49, 1
    %p53 = scmp.eq.s32.totalorder %s15, 3
    %p54 = scmp.ne.s32.totalorder %s49, %s51
    %p55 = scmp.eq.s32.totalorder %s15, 0
    %p56 = por %p54, %p55
    %p57 = scmp.ne.s32.totalorder %s49, %s51
    %p58 = scmp.eq.s32.totalorder %s20, 3
    %p59 = por %p57, %p58
    %p60 = scmp.ne.s32.totalorder %s51, %s52
    %p61 = scmp.eq.s32.totalorder %s20, 0
    %p62 = por %p60, %p61
    %p63 = scmp.ne.s32.totalorder %s51, %s52
    %p64 = scmp.eq.s32.totalorder %s21, 3
    %p65 = por %p63, %p64
    %p67 = scmp.ne.s32.totalorder %s52, %s66
    %p68 = scmp.eq.s32.totalorder %s21, 0
    %p69 = por %p67, %p68
    %s71 = sadd.s32 %s70, 1
    %p74 = scmp.eq.s32.totalorder %s15, 3
    %p75 = scmp.ne.s32.totalorder %s70, %s72
    %p76 = scmp.eq.s32.totalorder %s15, 0
    %p77 = por %p75, %p76
    %p78 = scmp.ne.s32.totalorder %s70, %s72
    %p79 = scmp.eq.s32.totalorder %s20, 3
    %p80 = por %p78, %p79
    %p81 = scmp.ne.s32.totalorder %s72, %s73
    %p82 = scmp.eq.s32.totalorder %s20, 0
    %p83 = por %p81, %p82
    %p84 = scmp.ne.s32.totalorder %s72, %s73
    %p85 = scmp.eq.s32.totalorder %s21, 3
    %p86 = por %p84, %p85
    %p88 = scmp.ne.s32.totalorder %s73, %s87
    %p89 = scmp.eq.s32.totalorder %s21, 0
    %p90 = por %p88, %p89
    %s92 = sadd.s32 %s91, 1
    %p95 = scmp.eq.s32.totalorder %s15, 3
    %p96 = scmp.ne.s32.totalorder %s91, %s93
    %p97 = scmp.eq.s32.totalorder %s15, 0
    %p98 = por %p96, %p97
    %p99 = scmp.ne.s32.totalorder %s91, %s93
    %p100 = scmp.eq.s32.totalorder %s20, 3
    %p101 = por %p99, %p100
    %p102 = scmp.ne.s32.totalorder %s93, %s94
    %p103 = scmp.eq.s32.totalorder %s20, 0
    %p104 = por %p102, %p103
    %p105 = scmp.ne.s32.totalorder %s93, %s94
    %p106 = scmp.eq.s32.totalorder %s21, 3
    %p107 = por %p105, %p106
    %p109 = scmp.ne.s32.totalorder %s94, %s108
    %p110 = scmp.eq.s32.totalorder %s21, 0
    %p111 = por %p109, %p110
    %s113 = sadd.s32 %s112, 1
    %p116 = scmp.eq.s32.totalorder %s15, 3
    %p117 = scmp.ne.s32.totalorder %s112, %s114
    %p118 = scmp.eq.s32.totalorder %s15, 0
    %p119 = por %p117, %p118
    %p120 = scmp.ne.s32.totalorder %s112, %s114
    %p121 = scmp.eq.s32.totalorder %s20, 3
    %p122 = por %p120, %p121
    %p123 = scmp.ne.s32.totalorder %s114, %s115
    %p124 = scmp.eq.s32.totalorder %s20, 0
    %p125 = por %p123, %p124
    %p126 = scmp.ne.s32.totalorder %s114, %s115
    %p127 = scmp.eq.s32.totalorder %s21, 3
    %p128 = por %p126, %p127
    %p130 = scmp.ne.s32.totalorder %s115, %s129
    %p131 = scmp.eq.s32.totalorder %s21, 0
    %p132 = por %p130, %p131
    %s134 = sadd.s32 %s133, 1
    %p137 = scmp.eq.s32.totalorder %s15, 3
    %p138 = scmp.ne.s32.totalorder %s133, %s135
    %p139 = scmp.eq.s32.totalorder %s15, 0
    %p140 = por %p138, %p139
    %p141 = scmp.ne.s32.totalorder %s133, %s135
    %p142 = scmp.eq.s32.totalorder %s20, 3
    %p143 = por %p141, %p142
    %p144 = scmp.ne.s32.totalorder %s135, %s136
    %p145 = scmp.eq.s32.totalorder %s20, 0
    %p146 = por %p144, %p145
    %p147 = scmp.ne.s32.totalorder %s135, %s136
    %p148 = scmp.eq.s32.totalorder %s21, 3
    %p149 = por %p147, %p148
    %p151 = scmp.ne.s32.totalorder %s136, %s150
    %p152 = scmp.eq.s32.totalorder %s21, 0
    %p153 = por %p151, %p152
    %s155 = sadd.s32 %s154, 1
    %p158 = scmp.eq.s32.totalorder %s15, 3
    %p159 = scmp.ne.s32.totalorder %s154, %s156
    %p160 = scmp.eq.s32.totalorder %s15, 0
    %p161 = por %p159, %p160
    %p162 = scmp.ne.s32.totalorder %s154, %s156
    %p163 = scmp.eq.s32.totalorder %s20, 3
    %p164 = por %p162, %p163
    %p165 = scmp.ne.s32.totalorder %s156, %s157
    %p166 = scmp.eq.s32.totalorder %s20, 0
    %p167 = por %p165, %p166
    %p168 = scmp.ne.s32.totalorder %s156, %s157
    %p169 = scmp.eq.s32.totalorder %s21, 3
    %p170 = por %p168, %p169
    %p172 = scmp.ne.s32.totalorder %s157, %s171
    %p173 = scmp.eq.s32.totalorder %s21, 0
    %p174 = por %p172, %p173
    %s176 = sadd.s32 %s175, 1
    %p179 = scmp.eq.s32.totalorder %s15, 3
    %p180 = scmp.ne.s32.totalorder %s175, %s177
    %p181 = scmp.eq.s32.totalorder %s15, 0
    %p182 = por %p180, %p181
    %p183 = scmp.ne.s32.totalorder %s175, %s177
    %p184 = scmp.eq.s32.totalorder %s20, 3
    %p185 = por %p183, %p184
    %p186 = scmp.ne.s32.totalorder %s177, %s178
    %p187 = scmp.eq.s32.totalorder %s20, 0
    %p188 = por %p186, %p187
    %p189 = scmp.ne.s32.totalorder %s177, %s178
    %p190 = scmp.eq.s32.totalorder %s21, 3
    %p191 = por %p189, %p190
    %p193 = scmp.ne.s32.totalorder %s178, %s192
    %p194 = scmp.eq.s32.totalorder %s21, 0
    %p195 = por %p193, %p194
    %s197 = sadd.s32 %s196, 1
    %p200 = scmp.eq.s32.totalorder %s15, 3
    %p201 = scmp.ne.s32.totalorder %s196, %s198
    %p202 = scmp.eq.s32.totalorder %s15, 0
    %p203 = por %p201, %p202
    %p204 = scmp.ne.s32.totalorder %s196, %s198
    %p205 = scmp.eq.s32.totalorder %s20, 3
    %p206 = por %p204, %p205
    %p207 = scmp.ne.s32.totalorder %s198, %s199
    %p208 = scmp.eq.s32.totalorder %s20, 0
    %p209 = por %p207, %p208
    %p210 = scmp.ne.s32.totalorder %s198, %s199
    %p211 = scmp.eq.s32.totalorder %s21, 3
    %p212 = por %p210, %p211
    %p214 = scmp.ne.s32.totalorder %s199, %s213
    %p215 = scmp.eq.s32.totalorder %s21, 0
    %p216 = por %p214, %p215
    %s217 = ssub.s32 %s15, %s22
    %p218 = scmp.eq.s32.totalorder %s217, 0
    %s220 = sadd.s32 %s219, 1
    %s221 = scalar_select %p218, %s219, %s220
    %p224 = pneg %p218
    %p225 = scmp.eq.s32.totalorder %s15, 3
    %p226 = por %p224, %p225
    %p227 = scmp.ne.s32.totalorder %s219, %s222
    %p228 = scmp.eq.s32.totalorder %s15, 0
    %p229 = por %p227, %p228
    %p230 = scmp.ne.s32.totalorder %s219, %s222
    %p231 = scmp.eq.s32.totalorder %s20, 3
    %p232 = por %p230, %p231
    %p233 = scmp.ne.s32.totalorder %s222, %s223
    %p234 = scmp.eq.s32.totalorder %s20, 0
    %p235 = por %p233, %p234
    %p236 = scmp.ne.s32.totalorder %s222, %s223
    %p237 = scmp.eq.s32.totalorder %s21, 3
    %p238 = por %p236, %p237
    %p240 = scmp.ne.s32.totalorder %s223, %s239
    %p241 = scmp.eq.s32.totalorder %s21, 0
    %p242 = por %p240, %p241
    %p243 = scmp.le.s32.totalorder 1, %s15
    %p244 = scmp.lt.s32.totalorder %s15, 5
    %p245 = pnand %p243, %p244
    %p246 = pneg %p245
    // Predicated region
    $region9: #{generator_forward.1} parent=5 // pred_check
      _
    $region10: #{generator_forward.1} parent=5 // pred_check_branch
      %248 = sbr.rel (%p245) target = $region12
    $region11: #{generator_forward.1} parent=5 // pred_region
      %s249 = ssub.s32 %s15, 1
      // Predicated region
      $region13: #{generator_forward.1} parent=11 // pred_check
        %p250 = pneg %p62
      $region14: #{generator_forward.1} parent=11 // pred_check_branch
        %252 = sbr.rel (%p250) target = $region16
      $region15: #{generator_forward.1} parent=11 // pred_region
        _
      $region16: #{generator_forward.1} parent=11 // pred_fallthru
        _
      // Predicated region
      $region17: #{generator_forward.1} parent=11 // pred_check
        %p253 = pneg %p83
      $region18: #{generator_forward.1} parent=11 // pred_check_branch
        %255 = sbr.rel (%p253) target = $region20
      $region19: #{generator_forward.1} parent=11 // pred_region
        _
      $region20: #{generator_forward.1} parent=11 // pred_fallthru
        _
      // Predicated region
      $region21: #{generator_forward.1} parent=11 // pred_check
        %p256 = pneg %p104
      $region22: #{generator_forward.1} parent=11 // pred_check_branch
        %258 = sbr.rel (%p256) target = $region24
      $region23: #{generator_forward.1} parent=11 // pred_region
        _
      $region24: #{generator_forward.1} parent=11 // pred_fallthru
        _
      // Predicated region
      $region25: #{generator_forward.1} parent=11 // pred_check
        %p259 = pneg %p125
      $region26: #{generator_forward.1} parent=11 // pred_check_branch
        %261 = sbr.rel (%p259) target = $region28
      $region27: #{generator_forward.1} parent=11 // pred_region
        _
      $region28: #{generator_forward.1} parent=11 // pred_fallthru
        _
      // Predicated region
      $region29: #{generator_forward.1} parent=11 // pred_check
        %p262 = pneg %p146
      $region30: #{generator_forward.1} parent=11 // pred_check_branch
        %264 = sbr.rel (%p262) target = $region32
      $region31: #{generator_forward.1} parent=11 // pred_region
        _
      $region32: #{generator_forward.1} parent=11 // pred_fallthru
        _
      // Predicated region
      $region33: #{generator_forward.1} parent=11 // pred_check
        %p265 = pneg %p167
      $region34: #{generator_forward.1} parent=11 // pred_check_branch
        %267 = sbr.rel (%p265) target = $region36
      $region35: #{generator_forward.1} parent=11 // pred_region
        _
      $region36: #{generator_forward.1} parent=11 // pred_fallthru
        _
      // Predicated region
      $region37: #{generator_forward.1} parent=11 // pred_check
        %p268 = pneg %p188
      $region38: #{generator_forward.1} parent=11 // pred_check_branch
        %270 = sbr.rel (%p268) target = $region40
      $region39: #{generator_forward.1} parent=11 // pred_region
        _
      $region40: #{generator_forward.1} parent=11 // pred_fallthru
        _
      // Predicated region
      $region41: #{generator_forward.1} parent=11 // pred_check
        %p271 = pneg %p209
      $region42: #{generator_forward.1} parent=11 // pred_check_branch
        %273 = sbr.rel (%p271) target = $region44
      $region43: #{generator_forward.1} parent=11 // pred_region
        _
      $region44: #{generator_forward.1} parent=11 // pred_fallthru
        _
    $region12: #{generator_forward.1} parent=5 // pred_fallthru
      _
    %p274 = scmp.lt.s32.totalorder %s15, 4
    // Predicated region
    $region45: #{generator_forward.1} parent=5 // pred_check
      %p275 = pneg %p274
    $region46: #{generator_forward.1} parent=5 // pred_check_branch
      %277 = sbr.rel (%p275) target = $region48
    $region47: #{generator_forward.1} parent=5 // pred_region
      // Predicated region
      $region49: #{generator_forward.1} parent=47 // pred_check
        %p278 = pneg %p35
      $region50: #{generator_forward.1} parent=47 // pred_check_branch
        %280 = sbr.rel (%p278) target = $region52
      $region51: #{generator_forward.1} parent=47 // pred_region
        %s281 = smul.u32 16, %s15
        %p282 = scmp.lt.s32.totalorder %s281, 63
        %s283 = scalar_select %p282, %s281, 63
        %s284 = smul.addr %s283, 8
        %s285 = scalar_lea.vmem %s0, %s284
        %s286 = smul.u32 16, %s15
      $region52: #{generator_forward.1} parent=47 // pred_fallthru
        _
    $region48: #{generator_forward.1} parent=5 // pred_fallthru
      _
    %p287 = scmp.le.s32.totalorder 1, %s15
    %p288 = scmp.lt.s32.totalorder %s15, 5
    %p289 = pnand %p287, %p288
    %p290 = pneg %p289
    // Predicated region
    $region53: #{generator_forward.1} parent=5 // pred_check
      _
    $region54: #{generator_forward.1} parent=5 // pred_check_branch
      %292 = sbr.rel (%p289) target = $region56
    $region55: #{generator_forward.1} parent=5 // pred_region
      %s293 = ssub.s32 %s15, 1
      %s294 = smul.u32 16, %s20
      %p295 = scmp.lt.s32.totalorder %s294, 63
      %s296 = scalar_select %p295, %s294, 63
      %s297 = smul.addr %s296, 8
      %s298 = scalar_lea.vmem %s0, %s297
      %p299 = pneg %p41
      %p300 = pneg %p38
      %p301 = pneg %p62
      %p302 = pneg %p59
      %p303 = pneg %p83
      %p304 = pneg %p80
      %p305 = pneg %p104
      %p306 = pneg %p101
      %p307 = pneg %p125
      %p308 = pneg %p122
      %p309 = pneg %p146
      %p310 = pneg %p143
      %p311 = pneg %p167
      %p312 = pneg %p164
      %p313 = pneg %p188
      %p314 = pneg %p185
      %p315 = pneg %p209
      %p316 = pneg %p206
      %p317 = pneg %p235
      %p318 = pneg %p232
      %s319 = smul.u32 16, %s20
      %p320 = scmp.lt.s32.totalorder %s319, 63
      %s321 = scalar_select %p320, %s319, 63
      %s322 = smul.addr %s321, 4
      %s323 = scalar_lea.vmem %s9, %s322
      %s324 = smul.u32 16, %s20
      %p325 = scmp.lt.s32.totalorder %s324, 63
      %s326 = scalar_select %p325, %s324, 63
      %s327 = smul.addr %s326, 8
      %s328 = scalar_lea.vmem %s0, %s327
      %s329 = smul.u32 16, %s20
      %s330 = smul.u32 16, %s20
      %p331 = scmp.lt.s32.totalorder %s330, 63
      %s332 = scalar_select %p331, %s330, 63
      %s333 = smul.addr %s332, 4
      %s334 = scalar_lea.vmem %s9, %s333
      %s335 = smul.u32 16, %s20
      %v337 = vld [vmem:[%s328] sm:$0xff]
      %v338 = vld [vmem:[%s328 + $0x8] sm:$0xff]
      %v339 = vld [vmem:[%s328 + $0x10] sm:$0xff]
      %v340 = vld [vmem:[%s328 + $0x18] sm:$0xff]
      %v341 = vld [vmem:[%s328 + $0x20] sm:$0xff]
      %v342 = vld [vmem:[%s328 + $0x28] sm:$0xff]
      %v343 = vld [vmem:[%s328 + $0x30] sm:$0xff]
      %v344 = vld [vmem:[%s328 + $0x38] sm:$0xff]
      %v345 = vld [vmem:[%s328 + $0x40] sm:$0xff]
      %v346 = vld [vmem:[%s328 + $0x48] sm:$0xff]
      %v347 = vld [vmem:[%s328 + $0x50] sm:$0xff]
      %v348 = vld [vmem:[%s328 + $0x58] sm:$0xff]
      %v349 = vld [vmem:[%s328 + $0x60] sm:$0xff]
      %v350 = vld [vmem:[%s328 + $0x68] sm:$0xff]
      %v351 = vld [vmem:[%s328 + $0x70] sm:$0xff]
      %v352 = vld [vmem:[%s328 + $0x78] sm:$0xff]
      %v353 = vpack.c.bf16 %v338, %v337
      %v354 = vpack.c.bf16 %v340, %v339
      %v355 = vpack.c.bf16 %v342, %v341
      %v356 = vpack.c.bf16 %v344, %v343
      %v357 = vpack.c.bf16 %v346, %v345
      %v358 = vpack.c.bf16 %v348, %v347
      %v359 = vpack.c.bf16 %v350, %v349
      %v360 = vpack.c.bf16 %v352, %v351
      %v361 = vld [vmem:[%s1] sm:$0xf]
      %v362 = vld [vmem:[%s1 + $0x4] sm:$0xf]
      %v363 = vld [vmem:[%s1 + $0x8] sm:$0xf]
      %v364 = vld [vmem:[%s1 + $0xc] sm:$0xf]
      %v365 = vld [vmem:[%s2] sm:$0x1]
      %v367 = vperm.slane %v365, 0
      %v373 = vunpack.c.l.b16 %v361
      %v374 = vunpack.c.l.b16 %v362
      %v375 = vunpack.c.l.b16 %v363
      %v376 = vunpack.c.l.b16 %v364
      %v377 = vpack.c.b16 %v374, %v373
      %v378 = vpack.c.b16 %v376, %v375
      %vm381 = vcmask 261120
      %v383 = vsel %vm381, %v353, 0
      %v386 = vsel %vm381, %v354, 0
      %v389 = vsel %vm381, %v355, 0
      %v392 = vsel %vm381, %v356, 0
      %v395 = vsel %vm381, %v357, 0
      %v398 = vsel %vm381, %v358, 0
      %v401 = vsel %vm381, %v359, 0
      %v404 = vsel %vm381, %v360, 0
      %406 = vmatpush.bf16.msra.mxu0 0
      %407 = vmatpush.bf16.msra.mxu0 0
      %408 = vmatpush.bf16.msra.mxu0 0
      %409 = vmatpush.bf16.msra.mxu0 0
      %410 = vmatpush.bf16.msra.mxu0 0
      %411 = vmatpush.bf16.msra.mxu0 0
      %412 = vmatpush.bf16.msra.mxu0 %v378
      %413 = vmatpush.bf16.msra.mxu0 %v377
      %414 = vmatmul.bf16.gmra.mxu0 %v383
      %v415 = vpop.f32.mrf.mxu0
      %v416 = vadd.f32 %v367, %v415
      %v417 = vpop.f32.mrf.mxu0
      %v418 = vadd.f32 %v367, %v417
      %419 = vmatmul.bf16.gmra.mxu0 %v386
      %v420 = vpop.f32.mrf.mxu0
      %v421 = vadd.f32 %v367, %v420
      %v422 = vpop.f32.mrf.mxu0
      %v423 = vadd.f32 %v367, %v422
      %424 = vmatmul.bf16.gmra.mxu0 %v389
      %v425 = vpop.f32.mrf.mxu0
      %v426 = vadd.f32 %v367, %v425
      %v427 = vpop.f32.mrf.mxu0
      %v428 = vadd.f32 %v367, %v427
      %429 = vmatmul.bf16.gmra.mxu0 %v392
      %v430 = vpop.f32.mrf.mxu0
      %v431 = vadd.f32 %v367, %v430
      %v432 = vpop.f32.mrf.mxu0
      %v433 = vadd.f32 %v367, %v432
      %434 = vmatmul.bf16.gmra.mxu0 %v395
      %v435 = vpop.f32.mrf.mxu0
      %v436 = vadd.f32 %v367, %v435
      %v437 = vpop.f32.mrf.mxu0
      %v438 = vadd.f32 %v367, %v437
      %439 = vmatmul.bf16.gmra.mxu0 %v398
      %v440 = vpop.f32.mrf.mxu0
      %v441 = vadd.f32 %v367, %v440
      %v442 = vpop.f32.mrf.mxu0
      %v443 = vadd.f32 %v367, %v442
      %444 = vmatmul.bf16.gmra.mxu0 %v401
      %v445 = vpop.f32.mrf.mxu0
      %v446 = vadd.f32 %v367, %v445
      %v447 = vpop.f32.mrf.mxu0
      %v448 = vadd.f32 %v367, %v447
      %449 = vmatmul.bf16.gmra.mxu0 %v404
      %v450 = vpop.f32.mrf.mxu0
      %v451 = vadd.f32 %v367, %v450
      %v452 = vpop.f32.mrf.mxu0
      %v453 = vadd.f32 %v367, %v452
      %454 = vdwg.mxu0
      %v455 = vmul.f32 %v416, 0.2
      %v456 = vmul.f32 %v418, 0.2
      %v457 = vmul.f32 %v421, 0.2
      %v458 = vmul.f32 %v423, 0.2
      %v459 = vmul.f32 %v426, 0.2
      %v460 = vmul.f32 %v428, 0.2
      %v461 = vmul.f32 %v431, 0.2
      %v462 = vmul.f32 %v433, 0.2
      %v463 = vmul.f32 %v436, 0.2
      %v464 = vmul.f32 %v438, 0.2
      %v465 = vmul.f32 %v441, 0.2
      %v466 = vmul.f32 %v443, 0.2
      %v467 = vmul.f32 %v446, 0.2
      %v468 = vmul.f32 %v448, 0.2
      %v469 = vmul.f32 %v451, 0.2
      %v470 = vmul.f32 %v453, 0.2
      %v471 = vmax.f32 %v416, %v455
      %v472 = vmax.f32 %v418, %v456
      %v473 = vmax.f32 %v421, %v457
      %v474 = vmax.f32 %v423, %v458
      %v475 = vmax.f32 %v426, %v459
      %v476 = vmax.f32 %v428, %v460
      %v477 = vmax.f32 %v431, %v461
      %v478 = vmax.f32 %v433, %v462
      %v479 = vmax.f32 %v436, %v463
      %v480 = vmax.f32 %v438, %v464
      %v481 = vmax.f32 %v441, %v465
      %v482 = vmax.f32 %v443, %v466
      %v483 = vmax.f32 %v446, %v467
      %v484 = vmax.f32 %v448, %v468
      %v485 = vmax.f32 %v451, %v469
      %v486 = vmax.f32 %v453, %v470
      %v487 = vpack.c.bf16 %v472, %v471
      %v488 = vpack.c.bf16 %v474, %v473
      %v489 = vpack.c.bf16 %v476, %v475
      %v490 = vpack.c.bf16 %v478, %v477
      %v491 = vpack.c.bf16 %v480, %v479
      %v492 = vpack.c.bf16 %v482, %v481
      %v493 = vpack.c.bf16 %v484, %v483
      %v494 = vpack.c.bf16 %v486, %v485
      %v495 = vld [vmem:[%s3] sm:$0xf]
      %v496 = vld [vmem:[%s3 + $0x4] sm:$0xf]
      %v497 = vld [vmem:[%s3 + $0x8] sm:$0xf]
      %v498 = vld [vmem:[%s3 + $0xc] sm:$0xf]
      %v499 = vld [vmem:[%s3 + $0x10] sm:$0xf]
      %v500 = vld [vmem:[%s3 + $0x14] sm:$0xf]
      %v501 = vld [vmem:[%s3 + $0x18] sm:$0xf]
      %v502 = vld [vmem:[%s3 + $0x1c] sm:$0xf]
      %v503 = vld [vmem:[%s3 + $0x20] sm:$0xf]
      %v504 = vld [vmem:[%s3 + $0x24] sm:$0xf]
      %v505 = vld [vmem:[%s3 + $0x28] sm:$0xf]
      %v506 = vld [vmem:[%s3 + $0x2c] sm:$0xf]
      %v507 = vld [vmem:[%s3 + $0x30] sm:$0xf]
      %v508 = vld [vmem:[%s3 + $0x34] sm:$0xf]
      %v509 = vld [vmem:[%s3 + $0x38] sm:$0xf]
      %v510 = vld [vmem:[%s3 + $0x3c] sm:$0xf]
      %v511 = vld [vmem:[%s4] sm:$0x1]
      %v513 = vperm.slane %v511, 0
      %v531 = vunpack.c.l.b16 %v495
      %v532 = vunpack.c.l.b16 %v496
      %v533 = vunpack.c.l.b16 %v497
      %v534 = vunpack.c.l.b16 %v498
      %v535 = vunpack.c.l.b16 %v499
      %v536 = vunpack.c.l.b16 %v500
      %v537 = vunpack.c.l.b16 %v501
      %v538 = vunpack.c.l.b16 %v502
      %v539 = vunpack.c.l.b16 %v503
      %v540 = vunpack.c.l.b16 %v504
      %v541 = vunpack.c.l.b16 %v505
      %v542 = vunpack.c.l.b16 %v506
      %v543 = vunpack.c.l.b16 %v507
      %v544 = vunpack.c.l.b16 %v508
      %v545 = vunpack.c.l.b16 %v509
      %v546 = vunpack.c.l.b16 %v510
      %v547 = vpack.c.b16 %v532, %v531
      %v548 = vpack.c.b16 %v534, %v533
      %v549 = vpack.c.b16 %v536, %v535
      %v550 = vpack.c.b16 %v538, %v537
      %v551 = vpack.c.b16 %v540, %v539
      %v552 = vpack.c.b16 %v542, %v541
      %v553 = vpack.c.b16 %v544, %v543
      %v554 = vpack.c.b16 %v546, %v545
      %563 = vmatpush.bf16.msra.mxu0 %v554
      %564 = vmatpush.bf16.msra.mxu0 %v553
      %565 = vmatpush.bf16.msra.mxu0 %v552
      %566 = vmatpush.bf16.msra.mxu0 %v551
      %567 = vmatpush.bf16.msra.mxu0 %v550
      %568 = vmatpush.bf16.msra.mxu0 %v549
      %569 = vmatpush.bf16.msra.mxu0 %v548
      %570 = vmatpush.bf16.msra.mxu0 %v547
      %571 = vmatmul.bf16.gmra.mxu0 %v487
      %v572 = vpop.f32.mrf.mxu0
      %v573 = vadd.f32 %v513, %v572
      %v574 = vpop.f32.mrf.mxu0
      %v575 = vadd.f32 %v513, %v574
      %576 = vmatmul.bf16.gmra.mxu0 %v488
      %v577 = vpop.f32.mrf.mxu0
      %v578 = vadd.f32 %v513, %v577
      %v579 = vpop.f32.mrf.mxu0
      %v580 = vadd.f32 %v513, %v579
      %581 = vmatmul.bf16.gmra.mxu0 %v489
      %v582 = vpop.f32.mrf.mxu0
      %v583 = vadd.f32 %v513, %v582
      %v584 = vpop.f32.mrf.mxu0
      %v585 = vadd.f32 %v513, %v584
      %586 = vmatmul.bf16.gmra.mxu0 %v490
      %v587 = vpop.f32.mrf.mxu0
      %v588 = vadd.f32 %v513, %v587
      %v589 = vpop.f32.mrf.mxu0
      %v590 = vadd.f32 %v513, %v589
      %591 = vmatmul.bf16.gmra.mxu0 %v491
      %v592 = vpop.f32.mrf.mxu0
      %v593 = vadd.f32 %v513, %v592
      %v594 = vpop.f32.mrf.mxu0
      %v595 = vadd.f32 %v513, %v594
      %596 = vmatmul.bf16.gmra.mxu0 %v492
      %v597 = vpop.f32.mrf.mxu0
      %v598 = vadd.f32 %v513, %v597
      %v599 = vpop.f32.mrf.mxu0
      %v600 = vadd.f32 %v513, %v599
      %601 = vmatmul.bf16.gmra.mxu0 %v493
      %v602 = vpop.f32.mrf.mxu0
      %v603 = vadd.f32 %v513, %v602
      %v604 = vpop.f32.mrf.mxu0
      %v605 = vadd.f32 %v513, %v604
      %606 = vmatmul.bf16.gmra.mxu0 %v494
      %v607 = vpop.f32.mrf.mxu0
      %v608 = vadd.f32 %v513, %v607
      %v609 = vpop.f32.mrf.mxu0
      %v610 = vadd.f32 %v513, %v609
      %611 = vdwg.mxu0
      %v612 = vmul.f32 %v573, 0.2
      %v613 = vmul.f32 %v575, 0.2
      %v614 = vmul.f32 %v578, 0.2
      %v615 = vmul.f32 %v580, 0.2
      %v616 = vmul.f32 %v583, 0.2
      %v617 = vmul.f32 %v585, 0.2
      %v618 = vmul.f32 %v588, 0.2
      %v619 = vmul.f32 %v590, 0.2
      %v620 = vmul.f32 %v593, 0.2
      %v621 = vmul.f32 %v595, 0.2
      %v622 = vmul.f32 %v598, 0.2
      %v623 = vmul.f32 %v600, 0.2
      %v624 = vmul.f32 %v603, 0.2
      %v625 = vmul.f32 %v605, 0.2
      %v626 = vmul.f32 %v608, 0.2
      %v627 = vmul.f32 %v610, 0.2
      %v628 = vmax.f32 %v573, %v612
      %v629 = vmax.f32 %v575, %v613
      %v630 = vmax.f32 %v578, %v614
      %v631 = vmax.f32 %v580, %v615
      %v632 = vmax.f32 %v583, %v616
      %v633 = vmax.f32 %v585, %v617
      %v634 = vmax.f32 %v588, %v618
      %v635 = vmax.f32 %v590, %v619
      %v636 = vmax.f32 %v593, %v620
      %v637 = vmax.f32 %v595, %v621
      %v638 = vmax.f32 %v598, %v622
      %v639 = vmax.f32 %v600, %v623
      %v640 = vmax.f32 %v603, %v624
      %v641 = vmax.f32 %v605, %v625
      %v642 = vmax.f32 %v608, %v626
      %v643 = vmax.f32 %v610, %v627
      %v644 = vpack.c.bf16 %v629, %v628
      %v645 = vpack.c.bf16 %v631, %v630
      %v646 = vpack.c.bf16 %v633, %v632
      %v647 = vpack.c.bf16 %v635, %v634
      %v648 = vpack.c.bf16 %v637, %v636
      %v649 = vpack.c.bf16 %v639, %v638
      %v650 = vpack.c.bf16 %v641, %v640
      %v651 = vpack.c.bf16 %v643, %v642
      %v652 = vld [vmem:[%s5] sm:$0xf]
      %v653 = vld [vmem:[%s5 + $0x4] sm:$0xf]
      %v654 = vld [vmem:[%s5 + $0x8] sm:$0xf]
      %v655 = vld [vmem:[%s5 + $0xc] sm:$0xf]
      %v656 = vld [vmem:[%s5 + $0x10] sm:$0xf]
      %v657 = vld [vmem:[%s5 + $0x14] sm:$0xf]
      %v658 = vld [vmem:[%s5 + $0x18] sm:$0xf]
      %v659 = vld [vmem:[%s5 + $0x1c] sm:$0xf]
      %v660 = vld [vmem:[%s5 + $0x20] sm:$0xf]
      %v661 = vld [vmem:[%s5 + $0x24] sm:$0xf]
      %v662 = vld [vmem:[%s5 + $0x28] sm:$0xf]
      %v663 = vld [vmem:[%s5 + $0x2c] sm:$0xf]
      %v664 = vld [vmem:[%s5 + $0x30] sm:$0xf]
      %v665 = vld [vmem:[%s5 + $0x34] sm:$0xf]
      %v666 = vld [vmem:[%s5 + $0x38] sm:$0xf]
      %v667 = vld [vmem:[%s5 + $0x3c] sm:$0xf]
      %v668 = vld [vmem:[%s6] sm:$0x1]
      %v670 = vperm.slane %v668, 0
      %v688 = vunpack.c.l.b16 %v652
      %v689 = vunpack.c.l.b16 %v653
      %v690 = vunpack.c.l.b16 %v654
      %v691 = vunpack.c.l.b16 %v655
      %v692 = vunpack.c.l.b16 %v656
      %v693 = vunpack.c.l.b16 %v657
      %v694 = vunpack.c.l.b16 %v658
      %v695 = vunpack.c.l.b16 %v659
      %v696 = vunpack.c.l.b16 %v660
      %v697 = vunpack.c.l.b16 %v661
      %v698 = vunpack.c.l.b16 %v662
      %v699 = vunpack.c.l.b16 %v663
      %v700 = vunpack.c.l.b16 %v664
      %v701 = vunpack.c.l.b16 %v665
      %v702 = vunpack.c.l.b16 %v666
      %v703 = vunpack.c.l.b16 %v667
      %v704 = vpack.c.b16 %v689, %v688
      %v705 = vpack.c.b16 %v691, %v690
      %v706 = vpack.c.b16 %v693, %v692
      %v707 = vpack.c.b16 %v695, %v694
      %v708 = vpack.c.b16 %v697, %v696
      %v709 = vpack.c.b16 %v699, %v698
      %v710 = vpack.c.b16 %v701, %v700
      %v711 = vpack.c.b16 %v703, %v702
      %720 = vmatpush.bf16.msra.mxu0 %v711
      %721 = vmatpush.bf16.msra.mxu0 %v710
      %722 = vmatpush.bf16.msra.mxu0 %v709
      %723 = vmatpush.bf16.msra.mxu0 %v708
      %724 = vmatpush.bf16.msra.mxu0 %v707
      %725 = vmatpush.bf16.msra.mxu0 %v706
      %726 = vmatpush.bf16.msra.mxu0 %v705
      %727 = vmatpush.bf16.msra.mxu0 %v704
      %728 = vmatmul.bf16.gmra.mxu0 %v644
      %v729 = vpop.f32.mrf.mxu0
      %v730 = vadd.f32 %v670, %v729
      %v731 = vpop.f32.mrf.mxu0
      %v732 = vadd.f32 %v670, %v731
      %733 = vmatmul.bf16.gmra.mxu0 %v645
      %v734 = vpop.f32.mrf.mxu0
      %v735 = vadd.f32 %v670, %v734
      %v736 = vpop.f32.mrf.mxu0
      %v737 = vadd.f32 %v670, %v736
      %738 = vmatmul.bf16.gmra.mxu0 %v646
      %v739 = vpop.f32.mrf.mxu0
      %v740 = vadd.f32 %v670, %v739
      %v741 = vpop.f32.mrf.mxu0
      %v742 = vadd.f32 %v670, %v741
      %743 = vmatmul.bf16.gmra.mxu0 %v647
      %v744 = vpop.f32.mrf.mxu0
      %v745 = vadd.f32 %v670, %v744
      %v746 = vpop.f32.mrf.mxu0
      %v747 = vadd.f32 %v670, %v746
      %748 = vmatmul.bf16.gmra.mxu0 %v648
      %v749 = vpop.f32.mrf.mxu0
      %v750 = vadd.f32 %v670, %v749
      %v751 = vpop.f32.mrf.mxu0
      %v752 = vadd.f32 %v670, %v751
      %753 = vmatmul.bf16.gmra.mxu0 %v649
      %v754 = vpop.f32.mrf.mxu0
      %v755 = vadd.f32 %v670, %v754
      %v756 = vpop.f32.mrf.mxu0
      %v757 = vadd.f32 %v670, %v756
      %758 = vmatmul.bf16.gmra.mxu0 %v650
      %v759 = vpop.f32.mrf.mxu0
      %v760 = vadd.f32 %v670, %v759
      %v761 = vpop.f32.mrf.mxu0
      %v762 = vadd.f32 %v670, %v761
      %763 = vmatmul.bf16.gmra.mxu0 %v651
      %v764 = vpop.f32.mrf.mxu0
      %v765 = vadd.f32 %v670, %v764
      %v766 = vpop.f32.mrf.mxu0
      %v767 = vadd.f32 %v670, %v766
      %768 = vdwg.mxu0
      %v769 = vmul.f32 %v730, 0.2
      %v770 = vmul.f32 %v732, 0.2
      %v771 = vmul.f32 %v735, 0.2
      %v772 = vmul.f32 %v737, 0.2
      %v773 = vmul.f32 %v740, 0.2
      %v774 = vmul.f32 %v742, 0.2
      %v775 = vmul.f32 %v745, 0.2
      %v776 = vmul.f32 %v747, 0.2
      %v777 = vmul.f32 %v750, 0.2
      %v778 = vmul.f32 %v752, 0.2
      %v779 = vmul.f32 %v755, 0.2
      %v780 = vmul.f32 %v757, 0.2
      %v781 = vmul.f32 %v760, 0.2
      %v782 = vmul.f32 %v762, 0.2
      %v783 = vmul.f32 %v765, 0.2
      %v784 = vmul.f32 %v767, 0.2
      %v785 = vmax.f32 %v730, %v769
      %v786 = vmax.f32 %v732, %v770
      %v787 = vmax.f32 %v735, %v771
      %v788 = vmax.f32 %v737, %v772
      %v789 = vmax.f32 %v740, %v773
      %v790 = vmax.f32 %v742, %v774
      %v791 = vmax.f32 %v745, %v775
      %v792 = vmax.f32 %v747, %v776
      %v793 = vmax.f32 %v750, %v777
      %v794 = vmax.f32 %v752, %v778
      %v795 = vmax.f32 %v755, %v779
      %v796 = vmax.f32 %v757, %v780
      %v797 = vmax.f32 %v760, %v781
      %v798 = vmax.f32 %v762, %v782
      %v799 = vmax.f32 %v765, %v783
      %v800 = vmax.f32 %v767, %v784
      %v801 = vpack.c.bf16 %v786, %v785
      %v802 = vpack.c.bf16 %v788, %v787
      %v803 = vpack.c.bf16 %v790, %v789
      %v804 = vpack.c.bf16 %v792, %v791
      %v805 = vpack.c.bf16 %v794, %v793
      %v806 = vpack.c.bf16 %v796, %v795
      %v807 = vpack.c.bf16 %v798, %v797
      %v808 = vpack.c.bf16 %v800, %v799
      %v809 = vld [vmem:[%s7] sm:$0xf]
      %v810 = vld [vmem:[%s7 + $0x4] sm:$0xf]
      %v811 = vld [vmem:[%s7 + $0x8] sm:$0xf]
      %v812 = vld [vmem:[%s7 + $0xc] sm:$0xf]
      %v813 = vld [vmem:[%s7 + $0x10] sm:$0xf]
      %v814 = vld [vmem:[%s7 + $0x14] sm:$0xf]
      %v815 = vld [vmem:[%s7 + $0x18] sm:$0xf]
      %v816 = vld [vmem:[%s7 + $0x1c] sm:$0xf]
      %v817 = vld [vmem:[%s7 + $0x20] sm:$0xf]
      %v818 = vld [vmem:[%s7 + $0x24] sm:$0xf]
      %v819 = vld [vmem:[%s7 + $0x28] sm:$0xf]
      %v820 = vld [vmem:[%s7 + $0x2c] sm:$0xf]
      %v821 = vld [vmem:[%s7 + $0x30] sm:$0xf]
      %v822 = vld [vmem:[%s7 + $0x34] sm:$0xf]
      %v823 = vld [vmem:[%s7 + $0x38] sm:$0xf]
      %v824 = vld [vmem:[%s7 + $0x3c] sm:$0xf]
      %v825 = vld [vmem:[%s8] sm:$0x1]
      %v827 = vperm.slane %v825, 0
      %v845 = vunpack.c.l.b16 %v809
      %v846 = vunpack.c.l.b16 %v810
      %v847 = vunpack.c.l.b16 %v811
      %v848 = vunpack.c.l.b16 %v812
      %v849 = vunpack.c.l.b16 %v813
      %v850 = vunpack.c.l.b16 %v814
      %v851 = vunpack.c.l.b16 %v815
      %v852 = vunpack.c.l.b16 %v816
      %v853 = vunpack.c.l.b16 %v817
      %v854 = vunpack.c.l.b16 %v818
      %v855 = vunpack.c.l.b16 %v819
      %v856 = vunpack.c.l.b16 %v820
      %v857 = vunpack.c.l.b16 %v821
      %v858 = vunpack.c.l.b16 %v822
      %v859 = vunpack.c.l.b16 %v823
      %v860 = vunpack.c.l.b16 %v824
      %v861 = vpack.c.b16 %v846, %v845
      %v862 = vpack.c.b16 %v848, %v847
      %v863 = vpack.c.b16 %v850, %v849
      %v864 = vpack.c.b16 %v852, %v851
      %v865 = vpack.c.b16 %v854, %v853
      %v866 = vpack.c.b16 %v856, %v855
      %v867 = vpack.c.b16 %v858, %v857
      %v868 = vpack.c.b16 %v860, %v859
      %877 = vmatpush.bf16.msra.mxu0 %v868
      %878 = vmatpush.bf16.msra.mxu0 %v867
      %879 = vmatpush.bf16.msra.mxu0 %v866
      %880 = vmatpush.bf16.msra.mxu0 %v865
      %881 = vmatpush.bf16.msra.mxu0 %v864
      %882 = vmatpush.bf16.msra.mxu0 %v863
      %883 = vmatpush.bf16.msra.mxu0 %v862
      %884 = vmatpush.bf16.msra.mxu0 %v861
      %885 = vmatmul.bf16.gmra.mxu0 %v801
      %v886 = vpop.f32.mrf.mxu0
      %v887 = vadd.f32 %v827, %v886
      %v888 = vpop.f32.mrf.mxu0
      %v889 = vadd.f32 %v827, %v888
      %890 = vmatmul.bf16.gmra.mxu0 %v802
      %v891 = vpop.f32.mrf.mxu0
      %v892 = vadd.f32 %v827, %v891
      %v893 = vpop.f32.mrf.mxu0
      %v894 = vadd.f32 %v827, %v893
      %895 = vmatmul.bf16.gmra.mxu0 %v803
      %v896 = vpop.f32.mrf.mxu0
      %v897 = vadd.f32 %v827, %v896
      %v898 = vpop.f32.mrf.mxu0
      %v899 = vadd.f32 %v827, %v898
      %900 = vmatmul.bf16.gmra.mxu0 %v804
      %v901 = vpop.f32.mrf.mxu0
      %v902 = vadd.f32 %v827, %v901
      %v903 = vpop.f32.mrf.mxu0
      %v904 = vadd.f32 %v827, %v903
      %905 = vmatmul.bf16.gmra.mxu0 %v805
      %v906 = vpop.f32.mrf.mxu0
      %v907 = vadd.f32 %v827, %v906
      %v908 = vpop.f32.mrf.mxu0
      %v909 = vadd.f32 %v827, %v908
      %910 = vmatmul.bf16.gmra.mxu0 %v806
      %v911 = vpop.f32.mrf.mxu0
      %v912 = vadd.f32 %v827, %v911
      %v913 = vpop.f32.mrf.mxu0
      %v914 = vadd.f32 %v827, %v913
      %915 = vmatmul.bf16.gmra.mxu0 %v807
      %v916 = vpop.f32.mrf.mxu0
      %v917 = vadd.f32 %v827, %v916
      %v918 = vpop.f32.mrf.mxu0
      %v919 = vadd.f32 %v827, %v918
      %920 = vmatmul.bf16.gmra.mxu0 %v808
      %v921 = vpop.f32.mrf.mxu0
      %v922 = vadd.f32 %v827, %v921
      %v923 = vpop.f32.mrf.mxu0
      %v924 = vadd.f32 %v827, %v923
      %925 = vdwg.mxu0
      %v926 = vtanh.pop %v887
      %v927 = vtanh.pop %v889
      %v928 = vtanh.pop %v892
      %v929 = vtanh.pop %v894
      %v930 = vtanh.pop %v897
      %v931 = vtanh.pop %v899
      %v932 = vtanh.pop %v902
      %v933 = vtanh.pop %v904
      %v934 = vtanh.pop %v907
      %v935 = vtanh.pop %v909
      %v936 = vtanh.pop %v912
      %v937 = vtanh.pop %v914
      %v938 = vtanh.pop %v917
      %v939 = vtanh.pop %v919
      %v940 = vtanh.pop %v922
      %v941 = vtanh.pop %v924
      %v942 = vpack.c.bf16 %v926, %v926
      %v943 = vpack.c.bf16 %v927, %v927
      %v944 = vpack.c.bf16 %v928, %v928
      %v945 = vpack.c.bf16 %v929, %v929
      %v946 = vpack.c.bf16 %v930, %v930
      %v947 = vpack.c.bf16 %v931, %v931
      %v948 = vpack.c.bf16 %v932, %v932
      %v949 = vpack.c.bf16 %v933, %v933
      %v950 = vpack.c.bf16 %v934, %v934
      %v951 = vpack.c.bf16 %v935, %v935
      %v952 = vpack.c.bf16 %v936, %v936
      %v953 = vpack.c.bf16 %v937, %v937
      %v954 = vpack.c.bf16 %v938, %v938
      %v955 = vpack.c.bf16 %v939, %v939
      %v956 = vpack.c.bf16 %v940, %v940
      %v957 = vpack.c.bf16 %v941, %v941
      %958 = vst [vmem:[%s334] sm:$0xf] %v942
      %959 = vst [vmem:[%s334 + $0x4] sm:$0xf] %v943
      %960 = vst [vmem:[%s334 + $0x8] sm:$0xf] %v944
      %961 = vst [vmem:[%s334 + $0xc] sm:$0xf] %v945
      %962 = vst [vmem:[%s334 + $0x10] sm:$0xf] %v946
      %963 = vst [vmem:[%s334 + $0x14] sm:$0xf] %v947
      %964 = vst [vmem:[%s334 + $0x18] sm:$0xf] %v948
      %965 = vst [vmem:[%s334 + $0x1c] sm:$0xf] %v949
      %966 = vst [vmem:[%s334 + $0x20] sm:$0xf] %v950
      %967 = vst [vmem:[%s334 + $0x24] sm:$0xf] %v951
      %968 = vst [vmem:[%s334 + $0x28] sm:$0xf] %v952
      %969 = vst [vmem:[%s334 + $0x2c] sm:$0xf] %v953
      %970 = vst [vmem:[%s334 + $0x30] sm:$0xf] %v954
      %971 = vst [vmem:[%s334 + $0x34] sm:$0xf] %v955
      %972 = vst [vmem:[%s334 + $0x38] sm:$0xf] %v956
      %973 = vst [vmem:[%s334 + $0x3c] sm:$0xf] %v957
      %s974 = smul.u32 16, %s20
      %p975 = scmp.lt.s32.totalorder %s974, 63
      %s976 = scalar_select %p975, %s974, 63
      %s977 = smul.addr %s976, 4
      %s978 = scalar_lea.vmem %s9, %s977
      // Predicated region
      $region57: #{generator_forward.1} parent=55 // pred_check
        %p979 = pneg %p232
      $region58: #{generator_forward.1} parent=55 // pred_check_branch
        %981 = sbr.rel (%p979) target = $region60
      $region59: #{generator_forward.1} parent=55 // pred_region
        %s982 = smul.u32 16, %s20
      $region60: #{generator_forward.1} parent=55 // pred_fallthru
        _
    $region56: #{generator_forward.1} parent=5 // pred_fallthru
      _
    %p983 = scmp.le.s32.totalorder 2, %s15
    // Predicated region
    $region61: #{generator_forward.1} parent=5 // pred_check
      %p984 = pneg %p983
    $region62: #{generator_forward.1} parent=5 // pred_check_branch
      %986 = sbr.rel (%p984) target = $region64
    $region63: #{generator_forward.1} parent=5 // pred_region
      %s987 = ssub.s32 %s15, 2
      // Predicated region
      $region65: #{generator_forward.1} parent=63 // pred_check
        %p988 = pneg %p238
      $region66: #{generator_forward.1} parent=63 // pred_check_branch
        %990 = sbr.rel (%p988) target = $region68
      $region67: #{generator_forward.1} parent=63 // pred_region
        %s991 = smul.u32 16, %s21
        %p992 = scmp.lt.s32.totalorder %s991, 63
        %s993 = scalar_select %p992, %s991, 63
        %s994 = smul.addr %s993, 4
        %s995 = scalar_lea.vmem %s9, %s994
      $region68: #{generator_forward.1} parent=63 // pred_fallthru
        _
    $region64: #{generator_forward.1} parent=5 // pred_fallthru
      _
  $region6: #{generator_forward.1} parent=0 // loop_footer
    %s19 = sadd.s32 1, %s15
  $region7: #{generator_forward.1} parent=0 // loop_footer_branch
    %14 = sbr.rel target = $region3
  $region8: #{generator_forward.1} parent=0 // loop_exit
    _

</llo_original>
